<compile_context>
chip_gen: v7x
topology: tpu7x:2x2x1
jax: 0.10.0
libtpu: 0.0.40
codegen_flags: <defaults>
</compile_context>

<pallas_src>
import jax
import jax.numpy as jnp
from jax.experimental import pallas as pl
from jax.experimental.pallas import tpu as pltpu

EPS = 1e-6
LANES = 128
SUBLANES = 8


def _standardize_kernel(d_ref, g_ref, m_ref, sd_ref, sg_ref):
    # Widen in-kernel (free VPU filler under the HBM stall).
    d = d_ref[...].astype(jnp.float32)      # (1, S, 128)
    g = g_ref[...].astype(jnp.float32)      # (1, S, 128)
    m = m_ref[...].astype(jnp.float32)      # binary 0/1 mask

    mask_num = jnp.sum(m)
    mask_num = jnp.where(mask_num == 0.0, EPS, mask_num)
    inv_n = 1.0 / mask_num                  # scalar reciprocal

    d_mean = jnp.sum(d * m) * inv_n
    g_mean = jnp.sum(g * m) * inv_n

    # Mean-absolute-deviation scale (+ eps), matching the PyTorch 'mar' path.
    d_std = jnp.sum(jnp.abs((d - d_mean) * m)) * inv_n + EPS
    g_std = jnp.sum(jnp.abs((g - g_mean) * m)) * inv_n + EPS

    # Recompute (d - mean); do NOT cache it — binding resource is HBM DMA.
    sd_ref[...] = ((d - d_mean) * (1.0 / d_std)).astype(sd_ref.dtype)
    sg_ref[...] = ((g - g_mean) * (1.0 / g_std)).astype(sg_ref.dtype)


def standardize_data(depth, gt, mask_hole):
    """depth, gt, mask_hole: (B, C, H, W) -> (sta_depth, sta_gt), input dtypes."""
    B, C, H, W = depth.shape
    N = C * H * W

    # Mask: keep native dtype to avoid an extra wrapper pass; bool -> int8 is
    # a same-width cast (exact for a 0/1 mask).
    mask = mask_hole.astype(jnp.int8) if mask_hole.dtype == jnp.bool_ else mask_hole

    if N % LANES == 0:
        # Fast path: pure-metadata reshape, zero extra HBM traffic.
        S = N // LANES
        pad = 0
        d3 = depth.reshape(B, S, LANES)
        g3 = gt.reshape(B, S, LANES)
        m3 = mask.reshape(B, S, LANES)
    else:
        # General path: pad to a sublane-clean multiple of 8*128.
        # TODO(synk): handle this tail fully in-kernel (broadcasted_iota < N
        # masked reductions + masked stores) to remove the pad/slice passes.
        Np = SUBLANES * LANES * pl.cdiv(N, SUBLANES * LANES)
        S = Np // LANES
        pad = Np - N
        padcfg = ((0, 0), (0, pad))
        d3 = jnp.pad(depth.reshape(B, N), padcfg).reshape(B, S, LANES)
        g3 = jnp.pad(gt.reshape(B, N), padcfg).reshape(B, S, LANES)
        m3 = jnp.pad(mask.reshape(B, N), padcfg).reshape(B, S, LANES)

    row_spec = pl.BlockSpec((1, S, LANES), lambda b: (b, 0, 0))

    elt = S * LANES
    bytes_in = elt * (d3.dtype.itemsize + g3.dtype.itemsize + m3.dtype.itemsize)
    bytes_out = elt * (depth.dtype.itemsize + gt.dtype.itemsize)
    tile_bytes = bytes_in + bytes_out

    # Clamp the scoped-VMEM request to the physical capacity (64 MiB/TC on
    # v7x, 128 MiB on v5e/v6e).
    try:
        vmem_cap = int(pltpu.get_tpu_info().vmem_capacity_bytes)
    except Exception:
        vmem_cap = 64 << 20  # conservative (v7x per-core)
    vmem_limit = min(max(2 * tile_bytes + (2 << 20), 16 << 20), vmem_cap - (4 << 20))
    # TODO(synk): when 2*tile_bytes approaches vmem_cap (huge samples on
    # v7x), switch to a manual in-sample pipeline: inputs as pl.ANY, chunked
    # pltpu.make_async_copy into one resident slab, chunked output DMA.

    cost = pl.CostEstimate(
        flops=10 * B * elt,
        transcendentals=0,
        bytes_accessed=B * (bytes_in + bytes_out),
    )

    sd3, sg3 = pl.pallas_call(
        _standardize_kernel,
        out_shape=(
            jax.ShapeDtypeStruct((B, S, LANES), depth.dtype),
            jax.ShapeDtypeStruct((B, S, LANES), gt.dtype),
        ),
        grid_spec=pltpu.PrefetchScalarGridSpec(
            num_scalar_prefetch=0,
            grid=(B,),                       # one sample per grid step
            in_specs=[row_spec, row_spec, row_spec],
            out_specs=[row_spec, row_spec],
        ),
        compiler_params=pltpu.CompilerParams(
            # Batch axis is independent -> shards across the 2 TCs on v7x.
            dimension_semantics=("parallel",),
            vmem_limit_bytes=int(vmem_limit),
        ),
        cost_estimate=cost,
    )(d3, g3, m3)

    if pad:
        sd = sd3.reshape(B, S * LANES)[:, :N].reshape(B, C, H, W)
        sg = sg3.reshape(B, S * LANES)[:, :N].reshape(B, C, H, W)
    else:
        sd = sd3.reshape(B, C, H, W)
        sg = sg3.reshape(B, C, H, W)
    return sd, sg


def _reference(depth, gt, mask, eps=EPS):
    # Pure-JAX reference matching __masked_mean_robust_standardization__.
    mask = mask.astype(jnp.float32)

    def stats(x):
        n = jnp.sum(mask, axis=(1, 2, 3))
        n = jnp.where(n == 0.0, eps, n)
        mean = jnp.sum(x * mask, axis=(1, 2, 3)) / n
        mean = mean.reshape(-1, 1, 1, 1)
        std = jnp.sum(jnp.abs((x - mean) * mask), axis=(1, 2, 3)) / n
        return mean, std.reshape(-1, 1, 1, 1) + eps

    t_d, s_d = stats(depth)
    t_g, s_g = stats(gt)
    return (depth - t_d) / s_d, (gt - t_g) / s_g


if __name__ == "__main__":
    key = jax.random.PRNGKey(0)
    k1, k2, k3 = jax.random.split(key, 3)

    # Fast path: N = C*H*W = 256 is a multiple of 128 -> no pad, no slice.
    B, C, H, W = 2, 1, 16, 16
    depth = jax.random.uniform(k1, (B, C, H, W), jnp.float32, 0.1, 10.0)
    gt = jax.random.uniform(k2, (B, C, H, W), jnp.float32, 0.1, 10.0)
    mask_hole = jax.random.uniform(k3, (B, C, H, W)) > 0.3   # bool 0/1 mask

    sta_depth, sta_gt = standardize_data(depth, gt, mask_hole)
    jax.block_until_ready((sta_depth, sta_gt))

    ref_d, ref_g = _reference(depth, gt, mask_hole.astype(jnp.float32))
    assert jnp.allclose(sta_depth, ref_d, atol=1e-4, rtol=1e-4)
    assert jnp.allclose(sta_gt, ref_g, atol=1e-4, rtol=1e-4)

    # General path: N = 150 is not a multiple of 128 -> padded, sliced back.
    B2, C2, H2, W2 = 2, 1, 15, 10
    kk1, kk2, kk3 = jax.random.split(jax.random.PRNGKey(1), 3)
    depth2 = jax.random.uniform(kk1, (B2, C2, H2, W2), jnp.float32, 0.1, 10.0)
    gt2 = jax.random.uniform(kk2, (B2, C2, H2, W2), jnp.float32, 0.1, 10.0)
    mask2 = jax.random.uniform(kk3, (B2, C2, H2, W2)) > 0.3

    sd2, sg2 = standardize_data(depth2, gt2, mask2)
    jax.block_until_ready((sd2, sg2))
    rd2, rg2 = _reference(depth2, gt2, mask2.astype(jnp.float32))
    assert jnp.allclose(sd2, rd2, atol=1e-4, rtol=1e-4)
    assert jnp.allclose(sg2, rg2, atol=1e-4, rtol=1e-4)

    print("KERNEL_OK")
</pallas_src>

<mosaic_0001>
module attributes {stable_mosaic.version = 11 : i64} {
  func.func @_standardize_kernel(%arg0: i32, %arg1: memref<1x2x128xf32, #tpu.memory_space<vmem>>, %arg2: memref<1x2x128xf32, #tpu.memory_space<vmem>>, %arg3: memref<1x2x128xi8, #tpu.memory_space<vmem>>, %arg4: memref<1x2x128xf32, #tpu.memory_space<vmem>>, %arg5: memref<1x2x128xf32, #tpu.memory_space<vmem>>) attributes {dimension_semantics = [#tpu.dimension_semantics<parallel>], iteration_bounds = array<i64: 2>, scalar_prefetch = 0 : i64, scratch_operands = 0 : i64, tpu.core_type = #tpu.core_type<tc>, window_params = [{transform_indices = @transform_0, window_bounds = array<i64: 1, 2, 128>}, {transform_indices = @transform_1, window_bounds = array<i64: 1, 2, 128>}, {transform_indices = @transform_2, window_bounds = array<i64: 1, 2, 128>}, {transform_indices = @transform_3, window_bounds = array<i64: 1, 2, 128>}, {transform_indices = @transform_4, window_bounds = array<i64: 1, 2, 128>}]} {
    %c0 = arith.constant 0 : index
    %c0_0 = arith.constant 0 : index
    %c0_1 = arith.constant 0 : index
    %0 = vector.load %arg1[%c0, %c0_0, %c0_1] : memref<1x2x128xf32, #tpu.memory_space<vmem>>, vector<1x2x128xf32>
    %c0_2 = arith.constant 0 : index
    %c0_3 = arith.constant 0 : index
    %c0_4 = arith.constant 0 : index
    %1 = vector.load %arg2[%c0_2, %c0_3, %c0_4] : memref<1x2x128xf32, #tpu.memory_space<vmem>>, vector<1x2x128xf32>
    %c0_5 = arith.constant 0 : index
    %c0_6 = arith.constant 0 : index
    %c0_7 = arith.constant 0 : index
    %2 = vector.load %arg3[%c0_5, %c0_6, %c0_7] : memref<1x2x128xi8, #tpu.memory_space<vmem>>, vector<1x2x128xi8>
    %3 = arith.sitofp %2 : vector<1x2x128xi8> to vector<1x2x128xf32>
    %4 = vector.shape_cast %3 : vector<1x2x128xf32> to vector<1x1x2x128xf32>
    %cst = arith.constant dense<0.000000e+00> : vector<1xf32>
    %5 = vector.multi_reduction <add>, %4, %cst [1, 2, 3] : vector<1x1x2x128xf32> to vector<1xf32>
    %6 = vector.shape_cast %5 : vector<1xf32> to vector<1x1x1x1xf32>
    %7 = vector.extract %6[0, 0, 0, 0] : f32 from vector<1x1x1x1xf32>
    %cst_8 = arith.constant 0.000000e+00 : f32
    %8 = arith.cmpf oeq, %7, %cst_8 : f32
    %cst_9 = arith.constant 9.99999997E-7 : f32
    %9 = arith.select %8, %cst_9, %7 : f32
    %cst_10 = arith.constant 1.000000e+00 : f32
    %10 = arith.divf %cst_10, %9 : f32
    %11 = arith.mulf %0, %3 : vector<1x2x128xf32>
    %12 = vector.shape_cast %11 : vector<1x2x128xf32> to vector<1x1x2x128xf32>
    %cst_11 = arith.constant dense<0.000000e+00> : vector<1xf32>
    %13 = vector.multi_reduction <add>, %12, %cst_11 [1, 2, 3] : vector<1x1x2x128xf32> to vector<1xf32>
    %14 = vector.shape_cast %13 : vector<1xf32> to vector<1x1x1x1xf32>
    %15 = vector.extract %14[0, 0, 0, 0] : f32 from vector<1x1x1x1xf32>
    %16 = arith.mulf %15, %10 : f32
    %17 = arith.mulf %1, %3 : vector<1x2x128xf32>
    %18 = vector.shape_cast %17 : vector<1x2x128xf32> to vector<1x1x2x128xf32>
    %cst_12 = arith.constant dense<0.000000e+00> : vector<1xf32>
    %19 = vector.multi_reduction <add>, %18, %cst_12 [1, 2, 3] : vector<1x1x2x128xf32> to vector<1xf32>
    %20 = vector.shape_cast %19 : vector<1xf32> to vector<1x1x1x1xf32>
    %21 = vector.extract %20[0, 0, 0, 0] : f32 from vector<1x1x1x1xf32>
    %22 = arith.mulf %21, %10 : f32
    %23 = vector.broadcast %16 : f32 to vector<1x2x128xf32>
    %24 = arith.subf %0, %23 : vector<1x2x128xf32>
    %25 = arith.mulf %24, %3 : vector<1x2x128xf32>
    %26 = math.absf %25 : vector<1x2x128xf32>
    %27 = vector.shape_cast %26 : vector<1x2x128xf32> to vector<1x1x2x128xf32>
    %cst_13 = arith.constant dense<0.000000e+00> : vector<1xf32>
    %28 = vector.multi_reduction <add>, %27, %cst_13 [1, 2, 3] : vector<1x1x2x128xf32> to vector<1xf32>
    %29 = vector.shape_cast %28 : vector<1xf32> to vector<1x1x1x1xf32>
    %30 = vector.extract %29[0, 0, 0, 0] : f32 from vector<1x1x1x1xf32>
    %31 = arith.mulf %30, %10 : f32
    %cst_14 = arith.constant 9.99999997E-7 : f32
    %32 = arith.addf %31, %cst_14 : f32
    %33 = vector.broadcast %22 : f32 to vector<1x2x128xf32>
    %34 = arith.subf %1, %33 : vector<1x2x128xf32>
    %35 = arith.mulf %34, %3 : vector<1x2x128xf32>
    %36 = math.absf %35 : vector<1x2x128xf32>
    %37 = vector.shape_cast %36 : vector<1x2x128xf32> to vector<1x1x2x128xf32>
    %cst_15 = arith.constant dense<0.000000e+00> : vector<1xf32>
    %38 = vector.multi_reduction <add>, %37, %cst_15 [1, 2, 3] : vector<1x1x2x128xf32> to vector<1xf32>
    %39 = vector.shape_cast %38 : vector<1xf32> to vector<1x1x1x1xf32>
    %40 = vector.extract %39[0, 0, 0, 0] : f32 from vector<1x1x1x1xf32>
    %41 = arith.mulf %40, %10 : f32
    %cst_16 = arith.constant 9.99999997E-7 : f32
    %42 = arith.addf %41, %cst_16 : f32
    %43 = vector.broadcast %16 : f32 to vector<1x2x128xf32>
    %44 = arith.subf %0, %43 : vector<1x2x128xf32>
    %cst_17 = arith.constant 1.000000e+00 : f32
    %45 = arith.divf %cst_17, %32 : f32
    %46 = vector.broadcast %45 : f32 to vector<1x2x128xf32>
    %47 = arith.mulf %44, %46 : vector<1x2x128xf32>
    %c0_18 = arith.constant 0 : index
    %c0_19 = arith.constant 0 : index
    %c0_20 = arith.constant 0 : index
    %48 = vector.load %arg4[%c0_18, %c0_19, %c0_20] : memref<1x2x128xf32, #tpu.memory_space<vmem>>, vector<1x2x128xf32>
    tpu.vector_store %arg4[%c0_18, %c0_19, %c0_20], %47 {strides = array<i32>} : memref<1x2x128xf32, #tpu.memory_space<vmem>>, vector<1x2x128xf32>,
    %49 = vector.broadcast %22 : f32 to vector<1x2x128xf32>
    %50 = arith.subf %1, %49 : vector<1x2x128xf32>
    %cst_21 = arith.constant 1.000000e+00 : f32
    %51 = arith.divf %cst_21, %42 : f32
    %52 = vector.broadcast %51 : f32 to vector<1x2x128xf32>
    %53 = arith.mulf %50, %52 : vector<1x2x128xf32>
    %c0_22 = arith.constant 0 : index
    %c0_23 = arith.constant 0 : index
    %c0_24 = arith.constant 0 : index
    %54 = vector.load %arg5[%c0_22, %c0_23, %c0_24] : memref<1x2x128xf32, #tpu.memory_space<vmem>>, vector<1x2x128xf32>
    tpu.vector_store %arg5[%c0_22, %c0_23, %c0_24], %53 {strides = array<i32>} : memref<1x2x128xf32, #tpu.memory_space<vmem>>, vector<1x2x128xf32>,
    return
  }
  func.func @transform_0(%arg0: i32) -> (i32, i32, i32) {
    %c0_i32 = arith.constant 0 : i32
    %c0_i32_0 = arith.constant 0 : i32
    %c0_i32_1 = arith.constant 0 : i32
    return %arg0, %c0_i32, %c0_i32_0 : i32, i32, i32
  }
  func.func @transform_1(%arg0: i32) -> (i32, i32, i32) {
    %c0_i32 = arith.constant 0 : i32
    %c0_i32_0 = arith.constant 0 : i32
    %c0_i32_1 = arith.constant 0 : i32
    return %arg0, %c0_i32, %c0_i32_0 : i32, i32, i32
  }
  func.func @transform_2(%arg0: i32) -> (i32, i32, i32) {
    %c0_i32 = arith.constant 0 : i32
    %c0_i32_0 = arith.constant 0 : i32
    %c0_i32_1 = arith.constant 0 : i32
    return %arg0, %c0_i32, %c0_i32_0 : i32, i32, i32
  }
  func.func @transform_3(%arg0: i32) -> (i32, i32, i32) {
    %c0_i32 = arith.constant 0 : i32
    %c0_i32_0 = arith.constant 0 : i32
    %c0_i32_1 = arith.constant 0 : i32
    return %arg0, %c0_i32, %c0_i32_0 : i32, i32, i32
  }
  func.func @transform_4(%arg0: i32) -> (i32, i32, i32) {
    %c0_i32 = arith.constant 0 : i32
    %c0_i32_0 = arith.constant 0 : i32
    %c0_i32_1 = arith.constant 0 : i32
    return %arg0, %c0_i32, %c0_i32_0 : i32, i32, i32
  }
}

</mosaic_0001>

<llo_original>
// kernel: tpu_custom_call.1
$region0: #{tpu_custom_call.1}
  #allocation0 [shape = 'u32[]', space=smem, size = 0x4, offset = 0x4, fixed_abs, tag = 'smem constant byte address 0x4 - core index']
  #allocation1 [shape = 'u32[144,128]{1,0:T(1,128)}', space=vmem, size = 0x12000, scoped, tag = 'internal scratch']
  %s0 = inlined_call_operand.hbm [shape: f32[2,2,128], index: 0, kind: input, shape index: {}]
  %s1 = inlined_call_operand.hbm [shape: f32[2,2,128], index: 1, kind: input, shape index: {}]
  %s2 = inlined_call_operand.vmem [shape: s8[2,2,128], index: 2, kind: input, shape index: {}]
  %s3 = inlined_call_operand.hbm [shape: f32[2,2,128], index: 3, kind: output, shape index: {0}]
  %s4 = inlined_call_operand.hbm [shape: f32[2,2,128], index: 4, kind: output, shape index: {1}]
  %5 = xla_tuple %s3, %s4
  %s6 = sld [smem:[#allocation0]]
  $region61: #{tpu_custom_call.1} parent=0
    _
  %s8 = ssub.s32 1, %s6
  %s9 = scalar_select 0, %s8, %s6
  $region1: #{tpu_custom_call.1} parent=0
    #allocation2 [shape = 'u8[2048]{0}', space=vmem, size = 0x800, scoped, tag = 'input window, operand 0']
    #allocation3 [shape = 's32[2]{0}', space=sflag, size = 0x8, scoped, tag = 'scoped memory for tpu_custom_call.1']
    #allocation4 [shape = 's32[2]{0}', space=sflag, size = 0x8, scoped, tag = 'scoped memory for tpu_custom_call.1']
    #allocation5 [shape = 'u8[2048]{0}', space=vmem, size = 0x800, scoped, tag = 'input window, operand 1']
    #allocation6 [shape = 's32[2]{0}', space=sflag, size = 0x8, scoped, tag = 'scoped memory for tpu_custom_call.1']
    #allocation7 [shape = 'u8[2048]{0}', space=vmem, size = 0x800, scoped, tag = 'output window, operand 0']
    #allocation8 [shape = 'u8[2048]{0}', space=vmem, size = 0x800, scoped, tag = 'output window, operand 1']
    #allocation9 [shape = 's32[2]{0}', space=sflag, size = 0x8, scoped, tag = 'scoped memory for tpu_custom_call.1']
    %10 = vsyncpa [#allocation3], 0
    %s11 = scalar_lea.sflag [#allocation3], 1
    %12 = vsyncpa %s11, 0
    %13 = vsyncpa [#allocation6], 0
    %s14 = scalar_lea.sflag [#allocation6], 1
    %15 = vsyncpa %s14, 0
    %16 = vsyncpa [#allocation4], 0
    %s17 = scalar_lea.sflag [#allocation4], 1
    %18 = vsyncpa %s17, 0
    %19 = vsyncpa [#allocation9], 0
    %s20 = scalar_lea.sflag [#allocation9], 1
    %21 = vsyncpa %s20, 0
    loop: start=0, step=1, limit=4
    $region2: #{tpu_custom_call.1} parent=1 // loop_pre_header
      _
    $region3: #{tpu_custom_call.1} parent=1 // loop_header
      %s23 = sphi 0, %s27
      %p24 = scmp.ge.s32.totalorder %s23, 4
      %s33 = sphi 0, %s35
      %s36 = sphi 0, %s33
      %s37 = sphi 0, %s36
      %s53 = sphi 0, %s37
      %s59 = sphi 0, %s61
      %s62 = sphi 0, %s59
      %s63 = sphi 0, %s62
      %s79 = sphi 0, %s63
      %s85 = sphi 0, %s87
      %s88 = sphi 0, %s85
      %s89 = sphi 0, %s88
      %s105 = sphi 0, %s89
      %s111 = sphi 0, %s113
      %s114 = sphi 0, %s111
      %s115 = sphi 0, %s114
      %s131 = sphi 0, %s115
      %s137 = sphi 0, %s139
      %s140 = sphi 0, %s137
      %s141 = sphi 0, %s140
      %s157 = sphi 0, %s141
    $region4: #{tpu_custom_call.1} parent=1 // loop_header_branch
      %26 = sbr.rel (%p24) target = $region8
    $region5: #{tpu_custom_call.1} parent=1 // loop_body
      %s28 = ssub.s32 %s23, 1
      %s29 = ssub.s32 %s23, 2
      %s30 = sadd.s32 %s23, 1
      %s31 = ssub.s32 %s23, %s30
      %p32 = scmp.eq.s32.totalorder %s31, 0
      %s34 = sadd.s32 %s33, 1
      %s35 = scalar_select %p32, %s33, %s34
      %p38 = pneg %p32
      %p39 = scmp.eq.s32.totalorder %s23, 1
      %p40 = por %p38, %p39
      %p41 = scmp.ne.s32.totalorder %s33, %s36
      %p42 = scmp.eq.s32.totalorder %s23, 0
      %p43 = por %p41, %p42
      %p44 = scmp.ne.s32.totalorder %s33, %s36
      %p45 = scmp.eq.s32.totalorder %s28, 1
      %p46 = por %p44, %p45
      %p47 = scmp.ne.s32.totalorder %s36, %s37
      %p48 = scmp.eq.s32.totalorder %s28, 0
      %p49 = por %p47, %p48
      %p50 = scmp.ne.s32.totalorder %s36, %s37
      %p51 = scmp.eq.s32.totalorder %s29, 1
      %p52 = por %p50, %p51
      %p54 = scmp.ne.s32.totalorder %s37, %s53
      %p55 = scmp.eq.s32.totalorder %s29, 0
      %p56 = por %p54, %p55
      %s57 = ssub.s32 %s23, %s30
      %p58 = scmp.eq.s32.totalorder %s57, 0
      %s60 = sadd.s32 %s59, 1
      %s61 = scalar_select %p58, %s59, %s60
      %p64 = pneg %p58
      %p65 = scmp.eq.s32.totalorder %s23, 1
      %p66 = por %p64, %p65
      %p67 = scmp.ne.s32.totalorder %s59, %s62
      %p68 = scmp.eq.s32.totalorder %s23, 0
      %p69 = por %p67, %p68
      %p70 = scmp.ne.s32.totalorder %s59, %s62
      %p71 = scmp.eq.s32.totalorder %s28, 1
      %p72 = por %p70, %p71
      %p73 = scmp.ne.s32.totalorder %s62, %s63
      %p74 = scmp.eq.s32.totalorder %s28, 0
      %p75 = por %p73, %p74
      %p76 = scmp.ne.s32.totalorder %s62, %s63
      %p77 = scmp.eq.s32.totalorder %s29, 1
      %p78 = por %p76, %p77
      %p80 = scmp.ne.s32.totalorder %s63, %s79
      %p81 = scmp.eq.s32.totalorder %s29, 0
      %p82 = por %p80, %p81
      %s83 = ssub.s32 %s23, %s30
      %p84 = scmp.eq.s32.totalorder %s83, 0
      %s86 = sadd.s32 %s85, 1
      %s87 = scalar_select %p84, %s85, %s86
      %p90 = pneg %p84
      %p91 = scmp.eq.s32.totalorder %s23, 1
      %p92 = por %p90, %p91
      %p93 = scmp.ne.s32.totalorder %s85, %s88
      %p94 = scmp.eq.s32.totalorder %s23, 0
      %p95 = por %p93, %p94
      %p96 = scmp.ne.s32.totalorder %s85, %s88
      %p97 = scmp.eq.s32.totalorder %s28, 1
      %p98 = por %p96, %p97
      %p99 = scmp.ne.s32.totalorder %s88, %s89
      %p100 = scmp.eq.s32.totalorder %s28, 0
      %p101 = por %p99, %p100
      %p102 = scmp.ne.s32.totalorder %s88, %s89
      %p103 = scmp.eq.s32.totalorder %s29, 1
      %p104 = por %p102, %p103
      %p106 = scmp.ne.s32.totalorder %s89, %s105
      %p107 = scmp.eq.s32.totalorder %s29, 0
      %p108 = por %p106, %p107
      %s109 = ssub.s32 %s23, %s30
      %p110 = scmp.eq.s32.totalorder %s109, 0
      %s112 = sadd.s32 %s111, 1
      %s113 = scalar_select %p110, %s111, %s112
      %p116 = pneg %p110
      %p117 = scmp.eq.s32.totalorder %s23, 1
      %p118 = por %p116, %p117
      %p119 = scmp.ne.s32.totalorder %s111, %s114
      %p120 = scmp.eq.s32.totalorder %s23, 0
      %p121 = por %p119, %p120
      %p122 = scmp.ne.s32.totalorder %s111, %s114
      %p123 = scmp.eq.s32.totalorder %s28, 1
      %p124 = por %p122, %p123
      %p125 = scmp.ne.s32.totalorder %s114, %s115
      %p126 = scmp.eq.s32.totalorder %s28, 0
      %p127 = por %p125, %p126
      %p128 = scmp.ne.s32.totalorder %s114, %s115
      %p129 = scmp.eq.s32.totalorder %s29, 1
      %p130 = por %p128, %p129
      %p132 = scmp.ne.s32.totalorder %s115, %s131
      %p133 = scmp.eq.s32.totalorder %s29, 0
      %p134 = por %p132, %p133
      %s135 = ssub.s32 %s23, %s30
      %p136 = scmp.eq.s32.totalorder %s135, 0
      %s138 = sadd.s32 %s137, 1
      %s139 = scalar_select %p136, %s137, %s138
      %p142 = pneg %p136
      %p143 = scmp.eq.s32.totalorder %s23, 1
      %p144 = por %p142, %p143
      %p145 = scmp.ne.s32.totalorder %s137, %s140
      %p146 = scmp.eq.s32.totalorder %s23, 0
      %p147 = por %p145, %p146
      %p148 = scmp.ne.s32.totalorder %s137, %s140
      %p149 = scmp.eq.s32.totalorder %s28, 1
      %p150 = por %p148, %p149
      %p151 = scmp.ne.s32.totalorder %s140, %s141
      %p152 = scmp.eq.s32.totalorder %s28, 0
      %p153 = por %p151, %p152
      %p154 = scmp.ne.s32.totalorder %s140, %s141
      %p155 = scmp.eq.s32.totalorder %s29, 1
      %p156 = por %p154, %p155
      %p158 = scmp.ne.s32.totalorder %s141, %s157
      %p159 = scmp.eq.s32.totalorder %s29, 0
      %p160 = por %p158, %p159
      %p161 = scmp.le.s32.totalorder 1, %s23
      %p162 = scmp.lt.s32.totalorder %s23, 3
      %p163 = pnand %p161, %p162
      %p164 = pneg %p163
      // Predicated region
      $region9: #{tpu_custom_call.1} parent=5 // pred_check
        _
      $region10: #{tpu_custom_call.1} parent=5 // pred_check_branch
        %166 = sbr.rel (%p163) target = $region12
      $region11: #{tpu_custom_call.1} parent=5 // pred_region
        %s167 = ssub.s32 %s23, 1
      $region12: #{tpu_custom_call.1} parent=5 // pred_fallthru
        _
      %p168 = scmp.lt.s32.totalorder %s23, 2
      // Predicated region
      $region13: #{tpu_custom_call.1} parent=5 // pred_check
        %p169 = pneg %p168
      $region14: #{tpu_custom_call.1} parent=5 // pred_check_branch
        %171 = sbr.rel (%p169) target = $region16
      $region15: #{tpu_custom_call.1} parent=5 // pred_region
        // Predicated region
        $region17: #{tpu_custom_call.1} parent=15 // pred_check
          %p172 = pneg %p43
        $region18: #{tpu_custom_call.1} parent=15 // pred_check_branch
          %174 = sbr.rel (%p172) target = $region20
        $region19: #{tpu_custom_call.1} parent=15 // pred_region
          %s175 = sand.u32 %s33, 1
          %s176 = scalar_lea.sflag [#allocation3], %s175
          %s177 = sand.u32 %s33, 1
          %s178 = smul.addr %s177, 2
          %s179 = scalar_lea.vmem [#allocation2], %s178
          %s181 = ssub.s32 32, 32
          %182 = vsyncadd %s176, %s181
          %s183 = smul.addr %s23, 32
          %s184 = scalar_lea.hbm %s0, %s183
          %s186 = sshll.u32 %s179, 4
          %s187 = int_to_ptr.vmem [resolvable:$true] %s186
          %189 = dma.hbm_to_vmem [thread:$0]  %s184, 32, %s187, %s176
        $region20: #{tpu_custom_call.1} parent=15 // pred_fallthru
          _
        // Predicated region
        $region21: #{tpu_custom_call.1} parent=15 // pred_check
          %p190 = pneg %p69
        $region22: #{tpu_custom_call.1} parent=15 // pred_check_branch
          %192 = sbr.rel (%p190) target = $region24
        $region23: #{tpu_custom_call.1} parent=15 // pred_region
          %s193 = sand.u32 %s59, 1
          %s194 = scalar_lea.sflag [#allocation6], %s193
          %s195 = sand.u32 %s59, 1
          %s196 = smul.addr %s195, 2
          %s197 = scalar_lea.vmem [#allocation5], %s196
          %s199 = ssub.s32 32, 32
          %200 = vsyncadd %s194, %s199
          %s201 = smul.addr %s23, 32
          %s202 = scalar_lea.hbm %s1, %s201
          %s204 = sshll.u32 %s197, 4
          %s205 = int_to_ptr.vmem [resolvable:$true] %s204
          %207 = dma.hbm_to_vmem [thread:$0]  %s202, 32, %s205, %s194
        $region24: #{tpu_custom_call.1} parent=15 // pred_fallthru
          _
        // Predicated region
        $region25: #{tpu_custom_call.1} parent=15 // pred_check
          %p208 = pneg %p95
        $region26: #{tpu_custom_call.1} parent=15 // pred_check_branch
          %210 = sbr.rel (%p208) target = $region28
        $region27: #{tpu_custom_call.1} parent=15 // pred_region
          %p211 = scmp.lt.s32.totalorder %s23, 1
          %s212 = scalar_select %p211, %s23, 1
          %s213 = scalar_lea.vmem %s2, %s212
        $region28: #{tpu_custom_call.1} parent=15 // pred_fallthru
          _
      $region16: #{tpu_custom_call.1} parent=5 // pred_fallthru
        _
      %p214 = scmp.le.s32.totalorder 1, %s23
      %p215 = scmp.lt.s32.totalorder %s23, 3
      %p216 = pnand %p214, %p215
      %p217 = pneg %p216
      // Predicated region
      $region29: #{tpu_custom_call.1} parent=5 // pred_check
        _
      $region30: #{tpu_custom_call.1} parent=5 // pred_check_branch
        %219 = sbr.rel (%p216) target = $region32
      $region31: #{tpu_custom_call.1} parent=5 // pred_region
        %s220 = ssub.s32 %s23, 1
        %s221 = sand.u32 %s36, 1
        %s222 = scalar_lea.sflag [#allocation3], %s221
        %s223 = sand.u32 %s36, 1
        %s224 = smul.addr %s223, 2
        %s225 = scalar_lea.vmem [#allocation2], %s224
        // Predicated region
        $region33: #{tpu_custom_call.1} parent=31 // pred_check
          %p226 = pneg %p49
        $region34: #{tpu_custom_call.1} parent=31 // pred_check_branch
          %228 = sbr.rel (%p226) target = $region36
        $region35: #{tpu_custom_call.1} parent=31 // pred_region
          %229 = dma.done %s222, 32
        $region36: #{tpu_custom_call.1} parent=31 // pred_fallthru
          _
        %s230 = sand.u32 %s62, 1
        %s231 = scalar_lea.sflag [#allocation6], %s230
        %s232 = sand.u32 %s62, 1
        %s233 = smul.addr %s232, 2
        %s234 = scalar_lea.vmem [#allocation5], %s233
        // Predicated region
        $region37: #{tpu_custom_call.1} parent=31 // pred_check
          %p235 = pneg %p75
        $region38: #{tpu_custom_call.1} parent=31 // pred_check_branch
          %237 = sbr.rel (%p235) target = $region40
        $region39: #{tpu_custom_call.1} parent=31 // pred_region
          %238 = dma.done %s231, 32
        $region40: #{tpu_custom_call.1} parent=31 // pred_fallthru
          _
        %s239 = sand.u32 %s36, 1
        %s240 = scalar_lea.sflag [#allocation3], %s239
        %s241 = sand.u32 %s36, 1
        %s242 = smul.addr %s241, 2
        %s243 = scalar_lea.vmem [#allocation2], %s242
        %p244 = pneg %p49
        %p245 = pneg %p46
        %s246 = sand.u32 %s62, 1
        %s247 = scalar_lea.sflag [#allocation6], %s246
        %s248 = sand.u32 %s62, 1
        %s249 = smul.addr %s248, 2
        %s250 = scalar_lea.vmem [#allocation5], %s249
        %p251 = pneg %p75
        %p252 = pneg %p72
        %p253 = scmp.lt.s32.totalorder %s28, 1
        %s254 = scalar_select %p253, %s28, 1
        %s255 = scalar_lea.vmem %s2, %s254
        %p256 = pneg %p101
        %p257 = pneg %p98
        %p258 = pneg %p127
        %p259 = pneg %p124
        %s260 = sand.u32 %s114, 1
        %s261 = scalar_lea.sflag [#allocation4], %s260
        %s262 = sand.u32 %s114, 1
        %s263 = smul.addr %s262, 2
        %s264 = scalar_lea.vmem [#allocation7], %s263
        %p265 = pneg %p153
        %p266 = pneg %p150
        %s267 = sand.u32 %s140, 1
        %s268 = scalar_lea.sflag [#allocation9], %s267
        %s269 = sand.u32 %s140, 1
        %s270 = smul.addr %s269, 2
        %s271 = scalar_lea.vmem [#allocation8], %s270
        %p272 = scmp.lt.s32.totalorder %s28, 1
        %s273 = scalar_select %p272, %s28, 1
        %s274 = scalar_lea.vmem %s2, %s273
        %v275 = vld [vmem:[%s225] sm:$0x3]
        %v276 = vld [vmem:[%s234] sm:$0x3]
        %v277 = vld [vmem:[%s274] sm:$0x1]
        %v278 = vunpack.c.0.s8 %v277
        %v279 = vcvt.s32.f32 %v278
        %vm280 = vcmask 1041408
        %v281 = vsel %vm280, %v279, 0.0
        %282 = vadd.xlane.f32.xlu0 %v281
        %v283 = vpop.xlane.xlu0 %282
        %v284 = vrot.slane %v283, 4
        %v285 = vadd.f32 %v283, %v284
        %v286 = vrot.slane %v285, 2
        %v287 = vadd.f32 %v285, %v286
        %v288 = vrot.slane %v287, 1
        %v289 = vadd.f32 %v287, %v288
        %s290 = vtos %v289
        %p291 = scmp.eq.f32.partialorder %s290, 0.0
        %s292 = scalar_select %p291, 1e-06, %s290
        %v293 = vstv %s292
        %v294 = vrcp.pop %v293
        %s295 = vtos %v294
        %v296 = vmul.f32 %v275, %v279
        %v297 = vsel %vm280, %v296, 0.0
        %298 = vadd.xlane.f32.xlu0 %v297
        %v299 = vpop.xlane.xlu0 %298
        %v300 = vrot.slane %v299, 4
        %v301 = vadd.f32 %v299, %v300
        %v302 = vrot.slane %v301, 2
        %v303 = vadd.f32 %v301, %v302
        %v304 = vrot.slane %v303, 1
        %v305 = vadd.f32 %v303, %v304
        %s306 = vtos %v305
        %s307 = smul.f32 %s306, %s295
        %v308 = vmul.f32 %v276, %v279
        %v309 = vsel %vm280, %v308, 0.0
        %310 = vadd.xlane.f32.xlu0 %v309
        %v311 = vpop.xlane.xlu0 %310
        %v312 = vrot.slane %v311, 4
        %v313 = vadd.f32 %v311, %v312
        %v314 = vrot.slane %v313, 2
        %v315 = vadd.f32 %v313, %v314
        %v316 = vrot.slane %v315, 1
        %v317 = vadd.f32 %v315, %v316
        %s318 = vtos %v317
        %s319 = smul.f32 %s318, %s295
        %v320 = vstv %s307
        %v321 = vsub.f32 %v275, %v320
        %v322 = vmul.f32 %v321, %v279
        %v323 = vand.u32 2147483647, %v322
        %v324 = vsel %vm280, %v323, 0.0
        %325 = vadd.xlane.f32.xlu0 %v324
        %v326 = vpop.xlane.xlu0 %325
        %v327 = vrot.slane %v326, 4
        %v328 = vadd.f32 %v326, %v327
        %v329 = vrot.slane %v328, 2
        %v330 = vadd.f32 %v328, %v329
        %v331 = vrot.slane %v330, 1
        %v332 = vadd.f32 %v330, %v331
        %s333 = vtos %v332
        %s334 = smul.f32 %s333, %s295
        %s335 = sadd.f32 %s334, 1e-06
        %v336 = vstv %s319
        %v337 = vsub.f32 %v276, %v336
        %v338 = vmul.f32 %v337, %v279
        %v339 = vand.u32 2147483647, %v338
        %v340 = vsel %vm280, %v339, 0.0
        %341 = vadd.xlane.f32.xlu0 %v340
        %v342 = vpop.xlane.xlu0 %341
        %v343 = vrot.slane %v342, 4
        %v344 = vadd.f32 %v342, %v343
        %v345 = vrot.slane %v344, 2
        %v346 = vadd.f32 %v344, %v345
        %v347 = vrot.slane %v346, 1
        %v348 = vadd.f32 %v346, %v347
        %s349 = vtos %v348
        %s350 = smul.f32 %s349, %s295
        %s351 = sadd.f32 %s350, 1e-06
        %v352 = vstv %s335
        %v353 = vrcp.pop %v352
        %s354 = vtos %v353
        %v355 = vstv %s354
        %v356 = vmul.f32 %v321, %v355
        %357 = vst [vmem:[%s264] sm:$0x3] %v356
        %v358 = vstv %s351
        %v359 = vrcp.pop %v358
        %s360 = vtos %v359
        %v361 = vstv %s360
        %v362 = vmul.f32 %v337, %v361
        %363 = vst [vmem:[%s271] sm:$0x3] %v362
        %s364 = sand.u32 %s114, 1
        %s365 = scalar_lea.sflag [#allocation4], %s364
        %s366 = sand.u32 %s114, 1
        %s367 = smul.addr %s366, 2
        %s368 = scalar_lea.vmem [#allocation7], %s367
        %s369 = sand.u32 %s140, 1
        %s370 = scalar_lea.sflag [#allocation9], %s369
        %s371 = sand.u32 %s140, 1
        %s372 = smul.addr %s371, 2
        %s373 = scalar_lea.vmem [#allocation8], %s372
        // Predicated region
        $region41: #{tpu_custom_call.1} parent=31 // pred_check
          %p374 = pneg %p124
        $region42: #{tpu_custom_call.1} parent=31 // pred_check_branch
          %376 = sbr.rel (%p374) target = $region44
        $region43: #{tpu_custom_call.1} parent=31 // pred_region
          %s378 = ssub.s32 32, 32
          %379 = vsyncadd %s365, %s378
          %s380 = smul.addr %s28, 32
          %s381 = scalar_lea.hbm %s3, %s380
          %s383 = sshll.u32 %s368, 4
          %s384 = int_to_ptr.vmem [resolvable:$true] %s383
          %386 = dma.vmem_to_hbm [thread:$0]  %s384, 32, %s381, %s365
        $region44: #{tpu_custom_call.1} parent=31 // pred_fallthru
          _
        // Predicated region
        $region45: #{tpu_custom_call.1} parent=31 // pred_check
          %p387 = pneg %p150
        $region46: #{tpu_custom_call.1} parent=31 // pred_check_branch
          %389 = sbr.rel (%p387) target = $region48
        $region47: #{tpu_custom_call.1} parent=31 // pred_region
          %s391 = ssub.s32 32, 32
          %392 = vsyncadd %s370, %s391
          %s393 = smul.addr %s28, 32
          %s394 = scalar_lea.hbm %s4, %s393
          %s396 = sshll.u32 %s373, 4
          %s397 = int_to_ptr.vmem [resolvable:$true] %s396
          %399 = dma.vmem_to_hbm [thread:$0]  %s397, 32, %s394, %s370
        $region48: #{tpu_custom_call.1} parent=31 // pred_fallthru
          _
      $region32: #{tpu_custom_call.1} parent=5 // pred_fallthru
        _
      %p400 = scmp.le.s32.totalorder 2, %s23
      // Predicated region
      $region49: #{tpu_custom_call.1} parent=5 // pred_check
        %p401 = pneg %p400
      $region50: #{tpu_custom_call.1} parent=5 // pred_check_branch
        %403 = sbr.rel (%p401) target = $region52
      $region51: #{tpu_custom_call.1} parent=5 // pred_region
        %s404 = ssub.s32 %s23, 2
        // Predicated region
        $region53: #{tpu_custom_call.1} parent=51 // pred_check
          %p405 = pneg %p130
        $region54: #{tpu_custom_call.1} parent=51 // pred_check_branch
          %407 = sbr.rel (%p405) target = $region56
        $region55: #{tpu_custom_call.1} parent=51 // pred_region
          %s408 = sand.u32 %s115, 1
          %s409 = scalar_lea.sflag [#allocation4], %s408
          %s410 = sand.u32 %s115, 1
          %s411 = smul.addr %s410, 2
          %s412 = scalar_lea.vmem [#allocation7], %s411
          %413 = dma.done %s409, 32
        $region56: #{tpu_custom_call.1} parent=51 // pred_fallthru
          _
        // Predicated region
        $region57: #{tpu_custom_call.1} parent=51 // pred_check
          %p414 = pneg %p156
        $region58: #{tpu_custom_call.1} parent=51 // pred_check_branch
          %416 = sbr.rel (%p414) target = $region60
        $region59: #{tpu_custom_call.1} parent=51 // pred_region
          %s417 = sand.u32 %s141, 1
          %s418 = scalar_lea.sflag [#allocation9], %s417
          %s419 = sand.u32 %s141, 1
          %s420 = smul.addr %s419, 2
          %s421 = scalar_lea.vmem [#allocation8], %s420
          %422 = dma.done %s418, 32
        $region60: #{tpu_custom_call.1} parent=51 // pred_fallthru
          _
      $region52: #{tpu_custom_call.1} parent=5 // pred_fallthru
        _
    $region6: #{tpu_custom_call.1} parent=1 // loop_footer
      %s27 = sadd.s32 1, %s23
    $region7: #{tpu_custom_call.1} parent=1 // loop_footer_branch
      %22 = sbr.rel target = $region3
    $region8: #{tpu_custom_call.1} parent=1 // loop_exit
      _
    %423 = vsyncpa [#allocation3], 1
    %s424 = scalar_lea.sflag [#allocation3], 1
    %425 = vsyncpa %s424, 1
    %426 = vsyncpa [#allocation6], 1
    %s427 = scalar_lea.sflag [#allocation6], 1
    %428 = vsyncpa %s427, 1
    %429 = vsyncpa [#allocation4], 1
    %s430 = scalar_lea.sflag [#allocation4], 1
    %431 = vsyncpa %s430, 1
    %432 = vsyncpa [#allocation9], 1
    %s433 = scalar_lea.sflag [#allocation9], 1
    %434 = vsyncpa %s433, 1

</llo_original>
